<compile_context>
chip_gen: v5e
topology: v5e:2x2
jax: 0.10.0
libtpu: 0.0.40
codegen_flags: <defaults>
</compile_context>

<pallas_src>
import jax
import jax.numpy as jnp
import numpy as np
from jax.experimental import pallas as pl
from jax.experimental.pallas import tpu as pltpu

# ----- static configuration (mirrors DynamicFusionGraph.__init__, 3 modalities) -----
IN_DIMS = (8, 12, 16)          # in_dimensions
D0, D1, D2 = IN_DIMS
D_SUM = sum(IN_DIMS)           # 36
OUT_DIM = 16                   # out_dimension
PAT_IN = 24                    # pattern_model first Linear in_features
EFF_IN = 24                    # efficacy_model core in_features
EFF_HID = 20                   # efficacy_model core out_features
TOTAL_EFF = (2 + 2 + 2) + 6 + 7   # = 19, exactly as computed in __init__

DIM_01 = D0 + D1               # 20
DIM_02 = D0 + D2               # 24
DIM_12 = D1 + D2               # 28
DIM_012 = D_SUM + 3 * OUT_DIM  # 84
DIM_T = D_SUM + 4 * OUT_DIM    # 100

# packed layouts ------------------------------------------------------------
PAIR_W = DIM_01 + DIM_02 + DIM_12          # 72  (x0|x1 | x0|x2 | x1|x2)
SC_W = TOTAL_EFF + PAIR_W + DIM_012 + DIM_T  # 19+72+84+100 = 275 scale columns

X_COLS = 128                   # [ x_cat(36) | 1 | x_pair(72) | zero pad(19) ]
OUT_COLS = 128                 # [ t(16) | o01|o02|o12(48) | o012(16) | eff(19) | pad ]

# weight-slab row layout (all starts sublane(8)-aligned)
R_SC = 0        # rows   0:37   augmented scales weight  [37, 275]  (row 36 = bias)
R_PAIR = 40     # rows  40:112  block-diag pairwise      [72, 48]
R_BPAIR = 112   # row  112      pairwise bias            [1, 48]
R_3 = 120       # rows 120:204  trimodal fused weight    [84, 16]
R_B3 = 204      # row  204      trimodal bias            [1, 16]
R_T = 208       # rows 208:308  t-network fused weight   [100, 16]
R_BT = 308      # row  308      t-network bias           [1, 16]
W_ROWS = 312
W_COLS = 384


def _round_up(x, m):
    return ((x + m - 1) // m) * m


# ------------------------------- fused kernel -------------------------------
def dfg_kernel(x_ref, w_ref, out_ref):
    x = x_ref[...]                                   # [TB, 128]
    x_cat1 = x[:, 0:D_SUM + 1]                       # [TB, 37]  = x_cat | 1
    x_pair = x[:, D_SUM + 1:D_SUM + 1 + PAIR_W]      # [TB, 72]

    # stage 1: efficacies + ALL per-column scales in one matmul (bias via ones column)
    scales = jnp.dot(x_cat1, w_ref[R_SC:R_SC + D_SUM + 1, 0:SC_W],
                     preferred_element_type=jnp.float32)          # [TB, 275]
    eff = scales[:, 0:TOTAL_EFF]                                   # [TB, 19]
    s_pair = scales[:, TOTAL_EFF:TOTAL_EFF + PAIR_W]               # [TB, 72]
    s_3 = scales[:, TOTAL_EFF + PAIR_W:TOTAL_EFF + PAIR_W + DIM_012]
    s_t = scales[:, TOTAL_EFF + PAIR_W + DIM_012:SC_W]             # [TB, 100]

    # stage 2: the three pairwise networks as one block-diagonal matmul (72 -> 48)
    o_pair = jnp.dot(x_pair * s_pair, w_ref[R_PAIR:R_PAIR + PAIR_W, 0:48],
                     preferred_element_type=jnp.float32) + w_ref[R_BPAIR:R_BPAIR + 1, 0:48]

    # stage 3: trimodal network (84 -> 16)
    base = jnp.concatenate([x[:, 0:D_SUM], o_pair], axis=1)       # [TB, 84]
    o012 = jnp.dot(base * s_3, w_ref[R_3:R_3 + DIM_012, 0:OUT_DIM],
                   preferred_element_type=jnp.float32) + w_ref[R_B3:R_B3 + 1, 0:OUT_DIM]

    # stage 4: t-network (100 -> 16)
    base_t = jnp.concatenate([base, o012], axis=1)                # [TB, 100]
    t_out = jnp.dot(base_t * s_t, w_ref[R_T:R_T + DIM_T, 0:OUT_DIM],
                    preferred_element_type=jnp.float32) + w_ref[R_BT:R_BT + 1, 0:OUT_DIM]

    # single lane-dense store of all six results
    pad = jnp.zeros((t_out.shape[0], OUT_COLS - (OUT_DIM + 48 + OUT_DIM + TOTAL_EFF)),
                    jnp.float32)
    out_ref[...] = jnp.concatenate([t_out, o_pair, o012, eff, pad], axis=1)


# ------------------- host-side algebraic fusion + packing -------------------
def _fuse_and_pack(params):
    (we0, be0, we1, be1, we2, be2,
     w01a, b01a, w01b, b01b,
     w02a, b02a, w02b, b02b,
     w12a, b12a, w12b, b12b,
     w3a, b3a, w3b, b3b,
     wta, bta, wtb, btb) = params

    # collapse the activation-free Linear chains (exact algebra)
    w_eff = we0 @ we1 @ we2                         # [36, 19]
    b_eff = (be0 @ we1 + be1) @ we2 + be2           # [1, 19]

    def fuse(wa, ba, wb, bb):
        return wa @ wb, ba @ wb + bb

    w01, b01 = fuse(w01a, b01a, w01b, b01b)         # [20,16]
    w02, b02 = fuse(w02a, b02a, w02b, b02b)         # [24,16]
    w12, b12 = fuse(w12a, b12a, w12b, b12b)         # [28,16]
    w3, b3 = fuse(w3a, b3a, w3b, b3b)               # [84,16]
    wt, bt = fuse(wta, bta, wtb, btb)               # [100,16]

    # 0/1 selection matrices replicating efficacy columns across feature segments
    def sel(col_ids, widths):
        s = np.zeros((TOTAL_EFF, int(sum(widths))), np.float32)
        off = 0
        for c, w in zip(col_ids, widths):
            s[c, off:off + w] = 1.0
            off += w
        return jnp.asarray(s)

    s_pair = sel(range(0, 6), (D0, D1, D0, D2, D1, D2))                            # [19,72]
    s_3 = sel(range(6, 12), (D0, D1, D2, OUT_DIM, OUT_DIM, OUT_DIM))               # [19,84]
    s_t = sel(range(12, 19), (D0, D1, D2, OUT_DIM, OUT_DIM, OUT_DIM, OUT_DIM))     # [19,100]

    # fold selection matrices + bias into one augmented scales weight [37, 275]
    w_sc = jnp.concatenate([w_eff, w_eff @ s_pair, w_eff @ s_3, w_eff @ s_t], axis=1)
    b_sc = jnp.concatenate([b_eff, b_eff @ s_pair, b_eff @ s_3, b_eff @ s_t], axis=1)
    w_sc_aug = jnp.concatenate([w_sc, b_sc], axis=0)                               # [37, 275]

    # block-diagonal pairwise weight [72, 48]
    w_pair = jnp.zeros((PAIR_W, 48), jnp.float32)
    w_pair = (w_pair.at[0:20, 0:16].set(w01)
                     .at[20:44, 16:32].set(w02)
                     .at[44:72, 32:48].set(w12))
    b_pair = jnp.concatenate([b01, b02, b12], axis=1)                              # [1, 48]

    # single weight slab
    slab = jnp.zeros((W_ROWS, W_COLS), jnp.float32)
    slab = slab.at[R_SC:R_SC + D_SUM + 1, 0:SC_W].set(w_sc_aug)
    slab = slab.at[R_PAIR:R_PAIR + PAIR_W, 0:48].set(w_pair)
    slab = slab.at[R_BPAIR:R_BPAIR + 1, 0:48].set(b_pair)
    slab = slab.at[R_3:R_3 + DIM_012, 0:OUT_DIM].set(w3)
    slab = slab.at[R_B3:R_B3 + 1, 0:OUT_DIM].set(b3)
    slab = slab.at[R_T:R_T + DIM_T, 0:OUT_DIM].set(wt)
    slab = slab.at[R_BT:R_BT + 1, 0:OUT_DIM].set(bt)
    return slab


# --------------------------------- wrapper ----------------------------------
def dynamic_fusion_graph(x0, x1, x2, params):
    """Returns (t_output, (o01, o02, o12, o012), efficacies) matching the PyTorch fusion()."""
    B = x0.shape[0]
    w_slab = _fuse_and_pack(params)

    tile_b = min(256, _round_up(B, 8))
    b_pad = _round_up(B, tile_b)

    # lane-dense activation slab built OUTSIDE the kernel (concat is free in XLA)
    x_cat = jnp.concatenate([x0, x1, x2], axis=1)                       # [B, 36]
    ones = jnp.ones((B, 1), jnp.float32)
    x_pair = jnp.concatenate([x0, x1, x0, x2, x1, x2], axis=1)          # [B, 72]
    pad_w = X_COLS - (D_SUM + 1 + PAIR_W)
    x_slab = jnp.concatenate([x_cat, ones, x_pair,
                              jnp.zeros((B, pad_w), jnp.float32)], axis=1)
    if b_pad != B:
        x_slab = jnp.pad(x_slab, ((0, b_pad - B), (0, 0)))

    flops = int(2 * b_pad * ((D_SUM + 1) * SC_W + PAIR_W * 48
                             + DIM_012 * OUT_DIM + DIM_T * OUT_DIM))
    bytes_accessed = int(4 * (b_pad * X_COLS + W_ROWS * W_COLS + b_pad * OUT_COLS))
    cost = pl.CostEstimate(flops=flops, transcendentals=0, bytes_accessed=bytes_accessed)

    out = pl.pallas_call(
        dfg_kernel,
        out_shape=jax.ShapeDtypeStruct((b_pad, OUT_COLS), jnp.float32),
        grid=(b_pad // tile_b,),
        in_specs=[pl.BlockSpec((tile_b, X_COLS), lambda i: (i, 0)),
                  pl.BlockSpec((W_ROWS, W_COLS), lambda i: (0, 0))],   # weights VMEM-resident
        out_specs=pl.BlockSpec((tile_b, OUT_COLS), lambda i: (i, 0)),
        compiler_params=pltpu.CompilerParams(dimension_semantics=("parallel",)),
        cost_estimate=cost,
    )(x_slab, w_slab)

    out = out[:B]
    t_out = out[:, 0:OUT_DIM]
    o01 = out[:, 16:32]
    o02 = out[:, 32:48]
    o12 = out[:, 48:64]
    o012 = out[:, 64:80]
    eff = out[:, 80:80 + TOTAL_EFF]
    return t_out, (o01, o02, o12, o012), eff


# ----------------------- parameter construction (deterministic) -----------------------
def init_linear(key, fan_in, fan_out):
    k1, k2 = jax.random.split(key)
    lim = 1.0 / np.sqrt(fan_in)
    w = jax.random.uniform(k1, (fan_in, fan_out), jnp.float32, -lim, lim)   # stored as [in, out]
    b = jax.random.uniform(k2, (1, fan_out), jnp.float32, -lim, lim)
    return w, b


def make_params(key):
    keys = jax.random.split(key, 10)
    # shared pattern_model Linear(24,16) -- PyTorch deep-copies the same init into every network
    wp, bp = init_linear(keys[0], PAT_IN, OUT_DIM)
    p = []
    # efficacy model: Linear(36,24) -> core Linear(24,20) -> Linear(20,19)
    p += init_linear(keys[1], D_SUM, EFF_IN)
    p += init_linear(keys[2], EFF_IN, EFF_HID)
    p += init_linear(keys[3], EFF_HID, TOTAL_EFF)
    # networks[(0,1)], [(0,2)], [(1,2)], [(0,1,2)]: Linear(dim, 24) -> pattern Linear(24, 16)
    for k, dim in zip(keys[4:8], (DIM_01, DIM_02, DIM_12, DIM_012)):
        p += init_linear(k, dim, PAT_IN)
        p += [wp, bp]
    # t_network: Linear(100, 24) -> pattern Linear(24, 16)
    p += init_linear(keys[8], DIM_T, PAT_IN)
    p += [wp, bp]
    return p


# ----------------------------- pure-JAX reference (unfused, mirrors PyTorch) -----------------------------
def reference(x0, x1, x2, params):
    (we0, be0, we1, be1, we2, be2,
     w01a, b01a, w01b, b01b,
     w02a, b02a, w02b, b02b,
     w12a, b12a, w12b, b12b,
     w3a, b3a, w3b, b3b,
     wta, bta, wtb, btb) = params
    lin = lambda h, w, b: jnp.dot(h, w, preferred_element_type=jnp.float32) + b
    x_cat = jnp.concatenate([x0, x1, x2], axis=1)
    eff = lin(lin(lin(x_cat, we0, be0), we1, be1), we2, be2)
    sc = lambda v, i: v * eff[:, i:i + 1]
    net = lambda inp, wa, ba, wb, bb: lin(lin(inp, wa, ba), wb, bb)
    o01 = net(jnp.concatenate([sc(x0, 0), sc(x1, 1)], axis=1), w01a, b01a, w01b, b01b)
    o02 = net(jnp.concatenate([sc(x0, 2), sc(x2, 3)], axis=1), w02a, b02a, w02b, b02b)
    o12 = net(jnp.concatenate([sc(x1, 4), sc(x2, 5)], axis=1), w12a, b12a, w12b, b12b)
    o012 = net(jnp.concatenate([sc(x0, 6), sc(x1, 7), sc(x2, 8),
                                sc(o01, 9), sc(o02, 10), sc(o12, 11)], axis=1),
               w3a, b3a, w3b, b3b)
    t_out = net(jnp.concatenate([sc(x0, 12), sc(x1, 13), sc(x2, 14),
                                 sc(o01, 15), sc(o02, 16), sc(o12, 17), sc(o012, 18)], axis=1),
                wta, bta, wtb, btb)
    return t_out, (o01, o02, o12, o012), eff


if __name__ == "__main__":
    root = jax.random.PRNGKey(0)
    k_x, k_p = jax.random.split(root)
    kx0, kx1, kx2 = jax.random.split(k_x, 3)
    B = 8
    x0 = jax.random.normal(kx0, (B, D0), jnp.float32)
    x1 = jax.random.normal(kx1, (B, D1), jnp.float32)
    x2 = jax.random.normal(kx2, (B, D2), jnp.float32)
    params = make_params(k_p)

    t_out, multi_outs, eff = dynamic_fusion_graph(x0, x1, x2, params)
    jax.block_until_ready(t_out)

    t_ref, multi_ref, eff_ref = reference(x0, x1, x2, params)
    np.testing.assert_allclose(np.asarray(t_out), np.asarray(t_ref), rtol=5e-3, atol=5e-3)
    np.testing.assert_allclose(np.asarray(eff), np.asarray(eff_ref), rtol=5e-3, atol=5e-3)
    for a, b in zip(multi_outs, multi_ref):
        np.testing.assert_allclose(np.asarray(a), np.asarray(b), rtol=5e-3, atol=5e-3)

    print("KERNEL_OK")
</pallas_src>

<mosaic_0001>
module attributes {stable_mosaic.version = 11 : i64} {
  func.func @dfg_kernel(%arg0: i32, %arg1: memref<8x128xf32, #tpu.memory_space<vmem>>, %arg2: memref<312x384xf32, #tpu.memory_space<vmem>>, %arg3: memref<8x128xf32, #tpu.memory_space<vmem>>) attributes {dimension_semantics = [#tpu.dimension_semantics<parallel>], iteration_bounds = array<i64: 1>, scalar_prefetch = 0 : i64, scratch_operands = 0 : i64, tpu.core_type = #tpu.core_type<tc>, window_params = [{transform_indices = @transform_0, window_bounds = array<i64: 8, 128>}, {pipeline_mode = #tpu.pipeline_mode<synchronous>, transform_indices = @transform_1, window_bounds = array<i64: 312, 384>}, {transform_indices = @transform_2, window_bounds = array<i64: 8, 128>}]} {
    %c0 = arith.constant 0 : index
    %c0_0 = arith.constant 0 : index
    %0 = vector.load %arg1[%c0, %c0_0] : memref<8x128xf32, #tpu.memory_space<vmem>>, vector<8x128xf32>
    %1 = vector.extract_strided_slice %0 {offsets = [0, 0], sizes = [8, 37], strides = [1, 1]} : vector<8x128xf32> to vector<8x37xf32>
    %2 = vector.extract_strided_slice %0 {offsets = [0, 37], sizes = [8, 72], strides = [1, 1]} : vector<8x128xf32> to vector<8x72xf32>
    %c0_1 = arith.constant 0 : index
    %c0_2 = arith.constant 0 : index
    %3 = vector.load %arg2[%c0_1, %c0_2] : memref<312x384xf32, #tpu.memory_space<vmem>>, vector<37x275xf32>
    %cst = arith.constant dense<0.000000e+00> : vector<8x275xf32>
    %4 = tpu.matmul %1, %3, %cst {dimension_numbers = #tpu.dot_dimension_numbers<[1], [0], [0], [1], [0, 0, 1, 1], [], []>} : vector<8x37xf32>, vector<37x275xf32>, vector<8x275xf32> -> vector<8x275xf32>
    %5 = vector.extract_strided_slice %4 {offsets = [0, 0], sizes = [8, 19], strides = [1, 1]} : vector<8x275xf32> to vector<8x19xf32>
    %6 = vector.extract_strided_slice %4 {offsets = [0, 19], sizes = [8, 72], strides = [1, 1]} : vector<8x275xf32> to vector<8x72xf32>
    %7 = vector.extract_strided_slice %4 {offsets = [0, 91], sizes = [8, 84], strides = [1, 1]} : vector<8x275xf32> to vector<8x84xf32>
    %8 = vector.extract_strided_slice %4 {offsets = [0, 175], sizes = [8, 100], strides = [1, 1]} : vector<8x275xf32> to vector<8x100xf32>
    %9 = arith.mulf %2, %6 : vector<8x72xf32>
    %c40 = arith.constant 40 : index
    %c0_3 = arith.constant 0 : index
    %10 = vector.load %arg2[%c40, %c0_3] : memref<312x384xf32, #tpu.memory_space<vmem>>, vector<72x48xf32>
    %cst_4 = arith.constant dense<0.000000e+00> : vector<8x48xf32>
    %11 = tpu.matmul %9, %10, %cst_4 {dimension_numbers = #tpu.dot_dimension_numbers<[1], [0], [0], [1], [0, 0, 1, 1], [], []>} : vector<8x72xf32>, vector<72x48xf32>, vector<8x48xf32> -> vector<8x48xf32>
    %c112 = arith.constant 112 : index
    %c0_5 = arith.constant 0 : index
    %12 = vector.load %arg2[%c112, %c0_5] : memref<312x384xf32, #tpu.memory_space<vmem>>, vector<1x48xf32>
    %13 = vector.broadcast %12 : vector<1x48xf32> to vector<8x48xf32>
    %14 = arith.addf %11, %13 : vector<8x48xf32>
    %15 = vector.extract_strided_slice %0 {offsets = [0, 0], sizes = [8, 36], strides = [1, 1]} : vector<8x128xf32> to vector<8x36xf32>
    %16 = tpu.concatenate %15, %14 in 1 : vector<8x36xf32>, vector<8x48xf32> -> vector<8x84xf32>
    %17 = arith.mulf %16, %7 : vector<8x84xf32>
    %c120 = arith.constant 120 : index
    %c0_6 = arith.constant 0 : index
    %18 = vector.load %arg2[%c120, %c0_6] : memref<312x384xf32, #tpu.memory_space<vmem>>, vector<84x16xf32>
    %cst_7 = arith.constant dense<0.000000e+00> : vector<8x16xf32>
    %19 = tpu.matmul %17, %18, %cst_7 {dimension_numbers = #tpu.dot_dimension_numbers<[1], [0], [0], [1], [0, 0, 1, 1], [], []>} : vector<8x84xf32>, vector<84x16xf32>, vector<8x16xf32> -> vector<8x16xf32>
    %c204 = arith.constant 204 : index
    %c0_8 = arith.constant 0 : index
    %20 = vector.load %arg2[%c204, %c0_8] : memref<312x384xf32, #tpu.memory_space<vmem>>, vector<1x16xf32>
    %21 = vector.broadcast %20 : vector<1x16xf32> to vector<8x16xf32>
    %22 = arith.addf %19, %21 : vector<8x16xf32>
    %23 = tpu.concatenate %16, %22 in 1 : vector<8x84xf32>, vector<8x16xf32> -> vector<8x100xf32>
    %24 = arith.mulf %23, %8 : vector<8x100xf32>
    %c208 = arith.constant 208 : index
    %c0_9 = arith.constant 0 : index
    %25 = vector.load %arg2[%c208, %c0_9] : memref<312x384xf32, #tpu.memory_space<vmem>>, vector<100x16xf32>
    %cst_10 = arith.constant dense<0.000000e+00> : vector<8x16xf32>
    %26 = tpu.matmul %24, %25, %cst_10 {dimension_numbers = #tpu.dot_dimension_numbers<[1], [0], [0], [1], [0, 0, 1, 1], [], []>} : vector<8x100xf32>, vector<100x16xf32>, vector<8x16xf32> -> vector<8x16xf32>
    %c308 = arith.constant 308 : index
    %c0_11 = arith.constant 0 : index
    %27 = vector.load %arg2[%c308, %c0_11] : memref<312x384xf32, #tpu.memory_space<vmem>>, vector<1x16xf32>
    %28 = vector.broadcast %27 : vector<1x16xf32> to vector<8x16xf32>
    %29 = arith.addf %26, %28 : vector<8x16xf32>
    %cst_12 = arith.constant 0.000000e+00 : f32
    %30 = vector.broadcast %cst_12 : f32 to vector<8x29xf32>
    %31 = tpu.concatenate %29, %14, %22, %5, %30 in 1 : vector<8x16xf32>, vector<8x48xf32>, vector<8x16xf32>, vector<8x19xf32>, vector<8x29xf32> -> vector<8x128xf32>
    %c0_13 = arith.constant 0 : index
    %c0_14 = arith.constant 0 : index
    %32 = vector.load %arg3[%c0_13, %c0_14] : memref<8x128xf32, #tpu.memory_space<vmem>>, vector<8x128xf32>
    tpu.vector_store %arg3[%c0_13, %c0_14], %31 {strides = array<i32>} : memref<8x128xf32, #tpu.memory_space<vmem>>, vector<8x128xf32>,
    return
  }
  func.func @transform_0(%arg0: i32) -> (i32, i32) {
    %c0_i32 = arith.constant 0 : i32
    %c0_i32_0 = arith.constant 0 : i32
    return %arg0, %c0_i32 : i32, i32
  }
  func.func @transform_1(%arg0: i32) -> (i32, i32) {
    %c0_i32 = arith.constant 0 : i32
    %c0_i32_0 = arith.constant 0 : i32
    %c0_i32_1 = arith.constant 0 : i32
    return %c0_i32, %c0_i32_0 : i32, i32
  }
  func.func @transform_2(%arg0: i32) -> (i32, i32) {
    %c0_i32 = arith.constant 0 : i32
    %c0_i32_0 = arith.constant 0 : i32
    return %arg0, %c0_i32 : i32, i32
  }
}

</mosaic_0001>

<llo_original>
// kernel: tpu_custom_call.1
$region0: #{tpu_custom_call.1}
  #allocation0 [shape = 'u32[]', space=smem, size = 0x4, offset = 0x4, fixed_abs, tag = 'smem constant byte address 0x4 - core index']
  #allocation1 [shape = 'u32[72,128]{1,0:T(1,128)}', space=vmem, size = 0x9000, scoped, tag = 'internal scratch']
  %s0 = inlined_call_operand.hbm [shape: f32[8,128], index: 0, kind: input, shape index: {}]
  %s1 = inlined_call_operand.hbm [shape: f32[312,384], index: 1, kind: input, shape index: {}]
  %s2 = inlined_call_operand.hbm [shape: f32[8,128], index: 2, kind: output, shape index: {}]
  %s3 = sld [smem:[#allocation0]]
  $region26: #{tpu_custom_call.1} parent=0
    _
  %s5 = ssub.s32 1, %s3
  %s6 = scalar_select 0, %s5, %s3
  $region1: #{tpu_custom_call.1} parent=0
    #allocation2 [shape = 'u8[4096]{0}', space=vmem, size = 0x1000, scoped, tag = 'input window, operand 0, single buffered']
    #allocation3 [shape = 's32[1]{0}', space=sflag, size = 0x4, scoped, tag = 'scoped memory for tpu_custom_call.1']
    #allocation4 [shape = 's32[1]{0}', space=sflag, size = 0x4, scoped, tag = 'scoped memory for tpu_custom_call.1']
    #allocation5 [shape = 'u8[479232]{0}', space=vmem, size = 0x75000, scoped, tag = 'input window, operand 1, single buffered']
    #allocation6 [shape = 's32[1]{0}', space=sflag, size = 0x4, scoped, tag = 'scoped memory for tpu_custom_call.1']
    #allocation7 [shape = 'u8[4096]{0}', space=vmem, size = 0x1000, scoped, tag = 'output window, operand 0, single buffered']
    %7 = vsyncpa [#allocation3], 0
    %8 = vsyncpa [#allocation6], 0
    %9 = vsyncpa [#allocation4], 0
    // Predicated region
    $region2: #{tpu_custom_call.1} parent=1 // pred_check
      _
    $region3: #{tpu_custom_call.1} parent=1 // pred_check_branch
      %11 = sbr.rel (0) target = $region5
    $region4: #{tpu_custom_call.1} parent=1 // pred_region
      %13 = vsyncadd [#allocation3], 0
      %s15 = sshll.u32 %s0, 4
      %s16 = int_to_ptr.hbm [resolvable:$true] %s15
      %s17 = sshll.u32 [#allocation2], 4
      %s18 = int_to_ptr.vmem [resolvable:$true] %s17
      %20 = dma.hbm_to_vmem [thread:$0]  %s16, 128, %s18, [#allocation3]
    $region5: #{tpu_custom_call.1} parent=1 // pred_fallthru
      _
    // Predicated region
    $region6: #{tpu_custom_call.1} parent=1 // pred_check
      _
    $region7: #{tpu_custom_call.1} parent=1 // pred_check_branch
      %22 = sbr.rel (0) target = $region9
    $region8: #{tpu_custom_call.1} parent=1 // pred_region
      %24 = vsyncadd [#allocation6], 0
      %s25 = sshll.u32 %s1, 4
      %s26 = int_to_ptr.hbm [resolvable:$true] %s25
      %s27 = sshll.u32 [#allocation5], 4
      %s28 = int_to_ptr.vmem [resolvable:$true] %s27
      %33 = dma.hbm_to_vmem [thread:$0]  %s26, 14976, %s28, [#allocation6], 384, 384, 24
    $region9: #{tpu_custom_call.1} parent=1 // pred_fallthru
      _
    // Predicated region
    $region10: #{tpu_custom_call.1} parent=1 // pred_check
      _
    $region11: #{tpu_custom_call.1} parent=1 // pred_check_branch
      %35 = sbr.rel (0) target = $region13
    $region12: #{tpu_custom_call.1} parent=1 // pred_region
      %37 = dma.done [#allocation3], 128
    $region13: #{tpu_custom_call.1} parent=1 // pred_fallthru
      _
    // Predicated region
    $region14: #{tpu_custom_call.1} parent=1 // pred_check
      _
    $region15: #{tpu_custom_call.1} parent=1 // pred_check_branch
      %39 = sbr.rel (0) target = $region17
    $region16: #{tpu_custom_call.1} parent=1 // pred_region
      %41 = dma.done [#allocation6], 14976
    $region17: #{tpu_custom_call.1} parent=1 // pred_fallthru
      _
    %v42 = vld [vmem:[#allocation2] sm:$0xff]
    %v43 = vld [vmem:[#allocation5] sm:$0xff]
    %v44 = vld [vmem:[#allocation5 + $0x8] sm:$0xff]
    %v45 = vld [vmem:[#allocation5 + $0x10] sm:$0xff]
    %v46 = vld [vmem:[#allocation5 + $0x18] sm:$0xff]
    %v47 = vld [vmem:[#allocation5 + $0x20] sm:$0xff]
    %v48 = vld [vmem:[#allocation5 + $0x28] sm:$0xff]
    %v49 = vld [vmem:[#allocation5 + $0x30] sm:$0xff]
    %v50 = vld [vmem:[#allocation5 + $0x38] sm:$0xff]
    %v51 = vld [vmem:[#allocation5 + $0x40] sm:$0xff]
    %v52 = vld [vmem:[#allocation5 + $0x48] sm:$0xff]
    %v53 = vld [vmem:[#allocation5 + $0x50] sm:$0xff]
    %v54 = vld [vmem:[#allocation5 + $0x58] sm:$0xff]
    %v55 = vld [vmem:[#allocation5 + $0x60] sm:$0x1f]
    %v56 = vld [vmem:[#allocation5 + $0x68] sm:$0x1f]
    %v57 = vld [vmem:[#allocation5 + $0x70] sm:$0x1f]
    %vm58 = vcmask 302080
    %v60 = vsel %vm58, %v42, 0
    %vm62 = vcmask 1044480
    %v64 = vsel %vm62, %v55, 0
    %v67 = vsel %vm62, %v56, 0
    %v70 = vsel %vm62, %v57, 0
    %72 = vmatpush.msra.mxu0 0.0
    %73 = vmatpush.msra.mxu0 0.0
    %74 = vmatpush.msra.mxu0 0.0
    %75 = vmatpush.msra.mxu0 0.0
    %76 = vmatpush.msra.mxu0 0.0
    %77 = vmatpush.msra.mxu0 0.0
    %78 = vmatpush.msra.mxu0 0.0
    %79 = vmatpush.msra.mxu0 0.0
    %80 = vmatpush.msra.mxu0 0.0
    %81 = vmatpush.msra.mxu0 0.0
    %82 = vmatpush.msra.mxu0 0.0
    %83 = vmatpush.msra.mxu0 %v64
    %84 = vmatpush.msra.mxu0 %v52
    %85 = vmatpush.msra.mxu0 %v49
    %86 = vmatpush.msra.mxu0 %v46
    %87 = vmatpush.msra.mxu0 %v43
    %88 = vmatmul.f32.gmra.mxu0 %v60
    %v89 = vpop.f32.mrf.mxu0
    %v90 = vadd.f32 0.0, %v89
    %91 = vdwg.mxu0
    %92 = vmatpush.msra.mxu0 0.0
    %93 = vmatpush.msra.mxu0 0.0
    %94 = vmatpush.msra.mxu0 0.0
    %95 = vmatpush.msra.mxu0 0.0
    %96 = vmatpush.msra.mxu0 0.0
    %97 = vmatpush.msra.mxu0 0.0
    %98 = vmatpush.msra.mxu0 0.0
    %99 = vmatpush.msra.mxu0 0.0
    %100 = vmatpush.msra.mxu0 0.0
    %101 = vmatpush.msra.mxu0 0.0
    %102 = vmatpush.msra.mxu0 0.0
    %103 = vmatpush.msra.mxu0 %v67
    %104 = vmatpush.msra.mxu0 %v53
    %105 = vmatpush.msra.mxu0 %v50
    %106 = vmatpush.msra.mxu0 %v47
    %107 = vmatpush.msra.mxu0 %v44
    %108 = vmatmul.f32.gmra.mxu0 %v60
    %v109 = vpop.f32.mrf.mxu0
    %v110 = vadd.f32 0.0, %v109
    %111 = vdwg.mxu0
    %112 = vmatpush.msra.mxu0 0.0
    %113 = vmatpush.msra.mxu0 0.0
    %114 = vmatpush.msra.mxu0 0.0
    %115 = vmatpush.msra.mxu0 0.0
    %116 = vmatpush.msra.mxu0 0.0
    %117 = vmatpush.msra.mxu0 0.0
    %118 = vmatpush.msra.mxu0 0.0
    %119 = vmatpush.msra.mxu0 0.0
    %120 = vmatpush.msra.mxu0 0.0
    %121 = vmatpush.msra.mxu0 0.0
    %122 = vmatpush.msra.mxu0 0.0
    %123 = vmatpush.msra.mxu0 %v70
    %124 = vmatpush.msra.mxu0 %v54
    %125 = vmatpush.msra.mxu0 %v51
    %126 = vmatpush.msra.mxu0 %v48
    %127 = vmatpush.msra.mxu0 %v45
    %128 = vmatmul.f32.gmra.mxu0 %v60
    %v129 = vpop.f32.mrf.mxu0
    %v130 = vadd.f32 0.0, %v129
    %131 = vdwg.mxu0
    %133 = vrot.lane.b32.xlu0 %v90, 18
    %v134 = vpop.permute.xlu0 %133
    %v136 = vmul.f32 %v42, %v134
    %v137 = vld [vmem:[#allocation5 + $0x78] sm:$0xff]
    %v138 = vld [vmem:[#allocation5 + $0x90] sm:$0xff]
    %v139 = vld [vmem:[#allocation5 + $0xa8] sm:$0xff]
    %v140 = vld [vmem:[#allocation5 + $0xc0] sm:$0xff]
    %v141 = vld [vmem:[#allocation5 + $0xd8] sm:$0xff]
    %v142 = vld [vmem:[#allocation5 + $0xf0] sm:$0xff]
    %v143 = vld [vmem:[#allocation5 + $0x108] sm:$0xff]
    %v144 = vld [vmem:[#allocation5 + $0x120] sm:$0xff]
    %v145 = vld [vmem:[#allocation5 + $0x138] sm:$0xff]
    %v146 = vld [vmem:[#allocation5 + $0x150] ss:$0 sm:$0xff]
    %148 = vrot.lane.b32.xlu0 %v136, 91
    %v149 = vpop.permute.xlu0 %148
    %vm150 = vcmask 588800
    %v151 = vsel %vm150, %v149, 0
    %153 = vmatpush.msra.mxu0 0.0
    %154 = vmatpush.msra.mxu0 0.0
    %155 = vmatpush.msra.mxu0 0.0
    %156 = vmatpush.msra.mxu0 0.0
    %157 = vmatpush.msra.mxu0 0.0
    %158 = vmatpush.msra.mxu0 0.0
    %159 = vmatpush.msra.mxu0 0.0
    %160 = vmatpush.msra.mxu0 %v145
    %161 = vmatpush.msra.mxu0 %v144
    %162 = vmatpush.msra.mxu0 %v143
    %163 = vmatpush.msra.mxu0 %v142
    %164 = vmatpush.msra.mxu0 %v141
    %165 = vmatpush.msra.mxu0 %v140
    %166 = vmatpush.msra.mxu0 %v139
    %167 = vmatpush.msra.mxu0 %v138
    %168 = vmatpush.msra.mxu0 %v137
    %169 = vmatmul.f32.gmra.mxu0 %v151
    %v170 = vpop.f32.mrf.mxu0
    %v171 = vadd.f32 %v146, %v170
    %172 = vdwg.mxu0
    %174 = vrot.lane.b32.xlu0 %v171, 36
    %v175 = vpop.permute.xlu0 %174
    %vm177 = vcmask 293888
    %v178 = vsel %vm177, %v42, %v175
    %180 = vrot.lane.b32.xlu0 %v90, 37
    %v181 = vpop.permute.xlu0 %180
    %182 = vrot.lane.b32.xlu0 %v110, 37
    %v183 = vpop.permute.xlu0 %182
    %v184 = vsel %vm58, %v181, %v183
    %v186 = vmul.f32 %v178, %v184
    %v187 = vld [vmem:[#allocation5 + $0x168] sm:$0xff]
    %v188 = vld [vmem:[#allocation5 + $0x180] sm:$0xff]
    %v189 = vld [vmem:[#allocation5 + $0x198] sm:$0xff]
    %v190 = vld [vmem:[#allocation5 + $0x1b0] sm:$0xff]
    %v191 = vld [vmem:[#allocation5 + $0x1c8] sm:$0xff]
    %v192 = vld [vmem:[#allocation5 + $0x1e0] sm:$0xff]
    %v193 = vld [vmem:[#allocation5 + $0x1f8] sm:$0xff]
    %v194 = vld [vmem:[#allocation5 + $0x210] sm:$0xff]
    %v195 = vld [vmem:[#allocation5 + $0x228] sm:$0xff]
    %v196 = vld [vmem:[#allocation5 + $0x240] sm:$0xff]
    %v197 = vld [vmem:[#allocation5 + $0x258] sm:$0xf]
    %v198 = vld [vmem:[#allocation5 + $0x25c] ss:$0 sm:$0xff]
    %vm199 = vcmask 687104
    %v201 = vsel %vm199, %v186, 0
    %vm203 = vcmask 1043456
    %v205 = vsel %vm203, %v197, 0
    %207 = vmatpush.msra.mxu0 0.0
    %208 = vmatpush.msra.mxu0 0.0
    %209 = vmatpush.msra.mxu0 0.0
    %210 = vmatpush.msra.mxu0 0.0
    %211 = vmatpush.msra.mxu0 0.0
    %212 = vmatpush.msra.mxu0 %v205
    %213 = vmatpush.msra.mxu0 %v196
    %214 = vmatpush.msra.mxu0 %v195
    %215 = vmatpush.msra.mxu0 %v194
    %216 = vmatpush.msra.mxu0 %v193
    %217 = vmatpush.msra.mxu0 %v192
    %218 = vmatpush.msra.mxu0 %v191
    %219 = vmatpush.msra.mxu0 %v190
    %220 = vmatpush.msra.mxu0 %v189
    %221 = vmatpush.msra.mxu0 %v188
    %222 = vmatpush.msra.mxu0 %v187
    %223 = vmatmul.f32.gmra.mxu0 %v201
    %v224 = vpop.f32.mrf.mxu0
    %v225 = vadd.f32 %v198, %v224
    %226 = vdwg.mxu0
    %228 = vrot.lane.b32.xlu0 %v225, 84
    %v229 = vpop.permute.xlu0 %228
    %v231 = vsel %vm199, %v178, %v229
    %233 = vrot.lane.b32.xlu0 %v110, 81
    %v234 = vpop.permute.xlu0 %233
    %235 = vrot.lane.b32.xlu0 %v130, 81
    %v236 = vpop.permute.xlu0 %235
    %vm237 = vcmask 662528
    %v238 = vsel %vm237, %v234, %v236
    %v240 = vmul.f32 %v231, %v238
    %v241 = vld [vmem:[#allocation5 + $0x270] sm:$0xff]
    %v242 = vld [vmem:[#allocation5 + $0x288] sm:$0xff]
    %v243 = vld [vmem:[#allocation5 + $0x2a0] sm:$0xff]
    %v244 = vld [vmem:[#allocation5 + $0x2b8] sm:$0xff]
    %v245 = vld [vmem:[#allocation5 + $0x2d0] sm:$0xff]
    %v246 = vld [vmem:[#allocation5 + $0x2e8] sm:$0xff]
    %v247 = vld [vmem:[#allocation5 + $0x300] sm:$0xff]
    %v248 = vld [vmem:[#allocation5 + $0x318] sm:$0xff]
    %v249 = vld [vmem:[#allocation5 + $0x330] sm:$0xff]
    %v250 = vld [vmem:[#allocation5 + $0x348] sm:$0xff]
    %v251 = vld [vmem:[#allocation5 + $0x360] sm:$0xff]
    %v252 = vld [vmem:[#allocation5 + $0x378] sm:$0xff]
    %v253 = vld [vmem:[#allocation5 + $0x390] sm:$0xf]
    %v254 = vld [vmem:[#allocation5 + $0x394] ss:$0 sm:$0xff]
    %vm255 = vcmask 818176
    %v257 = vsel %vm255, %v240, 0
    %v260 = vsel %vm203, %v253, 0
    %262 = vmatpush.msra.mxu0 0.0
    %263 = vmatpush.msra.mxu0 0.0
    %264 = vmatpush.msra.mxu0 0.0
    %265 = vmatpush.msra.mxu0 %v260
    %266 = vmatpush.msra.mxu0 %v252
    %267 = vmatpush.msra.mxu0 %v251
    %268 = vmatpush.msra.mxu0 %v250
    %269 = vmatpush.msra.mxu0 %v249
    %270 = vmatpush.msra.mxu0 %v248
    %271 = vmatpush.msra.mxu0 %v247
    %272 = vmatpush.msra.mxu0 %v246
    %273 = vmatpush.msra.mxu0 %v245
    %274 = vmatpush.msra.mxu0 %v244
    %275 = vmatpush.msra.mxu0 %v243
    %276 = vmatpush.msra.mxu0 %v242
    %277 = vmatpush.msra.mxu0 %v241
    %278 = vmatmul.f32.gmra.mxu0 %v257
    %v279 = vpop.f32.mrf.mxu0
    %v280 = vadd.f32 %v254, %v279
    %281 = vdwg.mxu0
    %282 = vrot.lane.b32.xlu0 %v171, 16
    %v283 = vpop.permute.xlu0 %282
    %285 = vrot.lane.b32.xlu0 %v225, 64
    %v286 = vpop.permute.xlu0 %285
    %288 = vrot.lane.b32.xlu0 %v90, 80
    %v289 = vpop.permute.xlu0 %288
    %vm291 = vcmask 130048
    %v292 = vsel %vm291, %v280, %v283
    %vm293 = vcmask 523264
    %v294 = vsel %vm293, %v292, %v286
    %vm295 = vcmask 654336
    %v296 = vsel %vm295, %v294, %v289
    %vm297 = vcmask 809984
    %v298 = vsel %vm297, %v296, 0.0
    %299 = vst [vmem:[#allocation7] sm:$0xff] %v298
    // Predicated region
    $region18: #{tpu_custom_call.1} parent=1 // pred_check
      _
    $region19: #{tpu_custom_call.1} parent=1 // pred_check_branch
      %301 = sbr.rel (0) target = $region21
    $region20: #{tpu_custom_call.1} parent=1 // pred_region
      %303 = vsyncadd [#allocation4], 0
      %s305 = sshll.u32 [#allocation7], 4
      %s306 = int_to_ptr.vmem [resolvable:$true] %s305
      %s307 = sshll.u32 %s2, 4
      %s308 = int_to_ptr.hbm [resolvable:$true] %s307
      %310 = dma.vmem_to_hbm [thread:$0]  %s306, 128, %s308, [#allocation4]
    $region21: #{tpu_custom_call.1} parent=1 // pred_fallthru
      _
    // Predicated region
    $region22: #{tpu_custom_call.1} parent=1 // pred_check
      _
    $region23: #{tpu_custom_call.1} parent=1 // pred_check_branch
      %312 = sbr.rel (0) target = $region25
    $region24: #{tpu_custom_call.1} parent=1 // pred_region
      %314 = dma.done [#allocation4], 128
    $region25: #{tpu_custom_call.1} parent=1 // pred_fallthru
      _
    %315 = vsyncpa [#allocation3], 1
    %316 = vsyncpa [#allocation6], 1
    %317 = vsyncpa [#allocation4], 1

</llo_original>
